<compile_context>
chip_gen: v7x
topology: tpu7x:2x2x1
jax: 0.10.0
libtpu: 0.0.40
codegen_flags: <defaults>
</compile_context>

<pallas_src>
import jax
import jax.numpy as jnp
from jax.experimental import pallas as pl
from jax.experimental.pallas import tpu as pltpu

LIFT_D = 400 - 12
IN_DIM = 12 + LIFT_D          # 400
OUT_DIM = 12


def _round_up(x, m):
    return ((x + m - 1) // m) * m


def decoder_kernel(y_ref,
                   w1_ref, b1_ref,
                   w2_ref, b2_ref,
                   w3_ref, b3_ref,
                   w4_ref, b4_ref,
                   o_ref):
    # Whole MLP hot path runs inside the kernel on the MXU/VPU/EUP.
    wdt = w1_ref.dtype            # compute dtype of the MXU operands
    y = y_ref[...]                # (tile_b, 400), f32 or bf16

    # Layer 1: accumulate in f32, tanh in f32 on VPU/EUP.
    h = jnp.dot(y, w1_ref[...], preferred_element_type=jnp.float32) + b1_ref[...]
    h = jnp.tanh(h)
    # Layers 2/3: cast activations to the weight dtype only for the MXU feed.
    h = jnp.dot(h.astype(wdt), w2_ref[...],
                preferred_element_type=jnp.float32) + b2_ref[...]
    h = jnp.tanh(h)
    h = jnp.dot(h.astype(wdt), w3_ref[...],
                preferred_element_type=jnp.float32) + b3_ref[...]
    h = jnp.tanh(h)
    # Output layer (no activation).
    o = jnp.dot(h.astype(wdt), w4_ref[...],
                preferred_element_type=jnp.float32) + b4_ref[...]
    o_ref[...] = o.astype(o_ref.dtype)


def decoder_forward(y, params, *, tile_b=512):
    """y: (B, 400). params: dict of w1..w4 (in,out layout), b1..b4 ((1,out), f32).

    tile_b: batch tile; sweep 256-1024 on real workloads (bias upward on v7x).
    It is clamped to a sublane-aligned value not exceeding the batch so small
    demo batches still run in a single step.  With large B the grid has many
    steps, so both v7x TensorCores get work via dimension_semantics=parallel.
    """
    B, D = y.shape
    assert D == IN_DIM
    H = params["w1"].shape[1]
    compute_dtype = params["w1"].dtype

    # Sublane packing factor: 8 for f32, 16 for bf16.
    sub = 8 * (4 // jnp.dtype(compute_dtype).itemsize)
    tile_b = max(sub, (min(int(tile_b), _round_up(B, sub)) // sub) * sub)

    grid = (pl.cdiv(B, tile_b),)

    # Cast the input to the compute dtype in the wrapper so the dominant
    # HBM read (B x 400) is done at the reduced width when params are bf16.
    y_in = y.astype(compute_dtype)

    def full_spec(shape):
        # Weights/biases: constant index map -> DMAed once, resident in VMEM.
        return pl.BlockSpec(shape, lambda i: (0,) * len(shape))

    in_itemsize = jnp.dtype(compute_dtype).itemsize
    weight_bytes = sum(int(v.size) * jnp.dtype(v.dtype).itemsize
                       for v in params.values())
    cost = pl.CostEstimate(
        flops=2 * B * (IN_DIM * H + 2 * H * H + H * OUT_DIM),
        transcendentals=3 * B * H,
        bytes_accessed=B * IN_DIM * in_itemsize + B * OUT_DIM * 4 + weight_bytes,
    )

    return pl.pallas_call(
        decoder_kernel,
        out_shape=jax.ShapeDtypeStruct((B, OUT_DIM), jnp.float32),
        grid_spec=pl.GridSpec(
            grid=grid,
            in_specs=[
                pl.BlockSpec((tile_b, IN_DIM), lambda i: (i, 0)),   # y tile
                full_spec((IN_DIM, H)), full_spec((1, H)),          # layer 1
                full_spec((H, H)),      full_spec((1, H)),          # layer 2
                full_spec((H, H)),      full_spec((1, H)),          # layer 3
                full_spec((H, OUT_DIM)), full_spec((1, OUT_DIM)),   # layer 4
            ],
            out_specs=pl.BlockSpec((tile_b, OUT_DIM), lambda i: (i, 0)),
        ),
        compiler_params=pltpu.CompilerParams(
            dimension_semantics=("parallel",),
            vmem_limit_bytes=32 * 1024 * 1024,
        ),
        cost_estimate=cost,
    )(y_in,
      params["w1"], params["b1"],
      params["w2"], params["b2"],
      params["w3"], params["b3"],
      params["w4"], params["b4"])


def init_decoder_params(key, n_hidden, dtype=jnp.float32):
    """Matches nn.init.normal_(weight, std=0.1), bias = 0.  Weights stored
    as (in, out) = transpose of the PyTorch (out, in) layout."""
    k1, k2, k3, k4 = jax.random.split(key, 4)
    std = 0.1
    params = {
        "w1": (std * jax.random.normal(k1, (IN_DIM, n_hidden), jnp.float32)).astype(dtype),
        "b1": jnp.zeros((1, n_hidden), jnp.float32),
        "w2": (std * jax.random.normal(k2, (n_hidden, n_hidden), jnp.float32)).astype(dtype),
        "b2": jnp.zeros((1, n_hidden), jnp.float32),
        "w3": (std * jax.random.normal(k3, (n_hidden, n_hidden), jnp.float32)).astype(dtype),
        "b3": jnp.zeros((1, n_hidden), jnp.float32),
        "w4": (std * jax.random.normal(k4, (n_hidden, OUT_DIM), jnp.float32)).astype(dtype),
        "b4": jnp.zeros((1, OUT_DIM), jnp.float32),
    }
    return params


def decoder_ref(y, p):
    h = jnp.tanh(y @ p["w1"].astype(jnp.float32) + p["b1"])
    h = jnp.tanh(h @ p["w2"].astype(jnp.float32) + p["b2"])
    h = jnp.tanh(h @ p["w3"].astype(jnp.float32) + p["b3"])
    return h @ p["w4"].astype(jnp.float32) + p["b4"]


if __name__ == "__main__":
    key = jax.random.PRNGKey(0)
    k_param, k_in = jax.random.split(key)

    n_hidden = 32
    batch = 16

    params = init_decoder_params(k_param, n_hidden)          # f32 params
    y = jax.random.normal(k_in, (batch, IN_DIM), jnp.float32)
    ref = decoder_ref(y, params)

    # 1) f32 path (tight tolerance).
    out = jax.block_until_ready(decoder_forward(y, params))
    assert out.shape == (batch, OUT_DIM)
    assert jnp.allclose(out, ref, atol=1e-5, rtol=1e-5), "f32 mismatch vs reference"

    # 2) bf16-weight path (halves HBM traffic, f32 accumulation); relaxed tol.
    params_bf16 = {k: (v.astype(jnp.bfloat16) if k.startswith("w") else v)
                   for k, v in params.items()}
    out_bf16 = jax.block_until_ready(decoder_forward(y, params_bf16))
    assert jnp.allclose(out_bf16, ref, atol=5e-2, rtol=5e-2), "bf16 mismatch vs reference"

    # 3) Batch not a multiple of the tile: exercises the masked final block.
    #    (Garbage rows in the padded block stay confined to their own M rows
    #    -- the K reduction is over in-bounds features -- and are discarded.)
    y2 = jax.random.normal(jax.random.PRNGKey(1), (20, IN_DIM), jnp.float32)
    out2 = jax.block_until_ready(decoder_forward(y2, params, tile_b=8))
    assert jnp.allclose(out2, decoder_ref(y2, params), atol=1e-5, rtol=1e-5), \
        "partial-block mismatch vs reference"

    print("KERNEL_OK")
</pallas_src>

<mosaic_0001>
module attributes {stable_mosaic.version = 11 : i64} {
  func.func @decoder_kernel(%arg0: i32, %arg1: memref<16x400xf32, #tpu.memory_space<vmem>>, %arg2: memref<400x32xf32, #tpu.memory_space<vmem>>, %arg3: memref<1x32xf32, #tpu.memory_space<vmem>>, %arg4: memref<32x32xf32, #tpu.memory_space<vmem>>, %arg5: memref<1x32xf32, #tpu.memory_space<vmem>>, %arg6: memref<32x32xf32, #tpu.memory_space<vmem>>, %arg7: memref<1x32xf32, #tpu.memory_space<vmem>>, %arg8: memref<32x12xf32, #tpu.memory_space<vmem>>, %arg9: memref<1x12xf32, #tpu.memory_space<vmem>>, %arg10: memref<16x12xf32, #tpu.memory_space<vmem>>) attributes {dimension_semantics = [#tpu.dimension_semantics<parallel>], iteration_bounds = array<i64: 1>, scalar_prefetch = 0 : i64, scratch_operands = 0 : i64, tpu.core_type = #tpu.core_type<tc>, window_params = [{transform_indices = @transform_0, window_bounds = array<i64: 16, 400>}, {pipeline_mode = #tpu.pipeline_mode<synchronous>, transform_indices = @transform_1, window_bounds = array<i64: 400, 32>}, {pipeline_mode = #tpu.pipeline_mode<synchronous>, transform_indices = @transform_2, window_bounds = array<i64: 1, 32>}, {pipeline_mode = #tpu.pipeline_mode<synchronous>, transform_indices = @transform_3, window_bounds = array<i64: 32, 32>}, {pipeline_mode = #tpu.pipeline_mode<synchronous>, transform_indices = @transform_4, window_bounds = array<i64: 1, 32>}, {pipeline_mode = #tpu.pipeline_mode<synchronous>, transform_indices = @transform_5, window_bounds = array<i64: 32, 32>}, {pipeline_mode = #tpu.pipeline_mode<synchronous>, transform_indices = @transform_6, window_bounds = array<i64: 1, 32>}, {pipeline_mode = #tpu.pipeline_mode<synchronous>, transform_indices = @transform_7, window_bounds = array<i64: 32, 12>}, {pipeline_mode = #tpu.pipeline_mode<synchronous>, transform_indices = @transform_8, window_bounds = array<i64: 1, 12>}, {transform_indices = @transform_9, window_bounds = array<i64: 16, 12>}]} {
    %c0 = arith.constant 0 : index
    %c0_0 = arith.constant 0 : index
    %0 = vector.load %arg1[%c0, %c0_0] : memref<16x400xf32, #tpu.memory_space<vmem>>, vector<16x400xf32>
    %c0_1 = arith.constant 0 : index
    %c0_2 = arith.constant 0 : index
    %1 = vector.load %arg2[%c0_1, %c0_2] : memref<400x32xf32, #tpu.memory_space<vmem>>, vector<400x32xf32>
    %cst = arith.constant dense<0.000000e+00> : vector<16x32xf32>
    %2 = tpu.matmul %0, %1, %cst {dimension_numbers = #tpu.dot_dimension_numbers<[1], [0], [0], [1], [0, 0, 1, 1], [], []>} : vector<16x400xf32>, vector<400x32xf32>, vector<16x32xf32> -> vector<16x32xf32>
    %c0_3 = arith.constant 0 : index
    %c0_4 = arith.constant 0 : index
    %3 = vector.load %arg3[%c0_3, %c0_4] : memref<1x32xf32, #tpu.memory_space<vmem>>, vector<1x32xf32>
    %4 = vector.broadcast %3 : vector<1x32xf32> to vector<16x32xf32>
    %5 = arith.addf %2, %4 : vector<16x32xf32>
    %6 = math.tanh %5 : vector<16x32xf32>
    %c0_5 = arith.constant 0 : index
    %c0_6 = arith.constant 0 : index
    %7 = vector.load %arg4[%c0_5, %c0_6] : memref<32x32xf32, #tpu.memory_space<vmem>>, vector<32x32xf32>
    %cst_7 = arith.constant dense<0.000000e+00> : vector<16x32xf32>
    %8 = tpu.matmul %6, %7, %cst_7 {dimension_numbers = #tpu.dot_dimension_numbers<[1], [0], [0], [1], [0, 0, 1, 1], [], []>} : vector<16x32xf32>, vector<32x32xf32>, vector<16x32xf32> -> vector<16x32xf32>
    %c0_8 = arith.constant 0 : index
    %c0_9 = arith.constant 0 : index
    %9 = vector.load %arg5[%c0_8, %c0_9] : memref<1x32xf32, #tpu.memory_space<vmem>>, vector<1x32xf32>
    %10 = vector.broadcast %9 : vector<1x32xf32> to vector<16x32xf32>
    %11 = arith.addf %8, %10 : vector<16x32xf32>
    %12 = math.tanh %11 : vector<16x32xf32>
    %c0_10 = arith.constant 0 : index
    %c0_11 = arith.constant 0 : index
    %13 = vector.load %arg6[%c0_10, %c0_11] : memref<32x32xf32, #tpu.memory_space<vmem>>, vector<32x32xf32>
    %cst_12 = arith.constant dense<0.000000e+00> : vector<16x32xf32>
    %14 = tpu.matmul %12, %13, %cst_12 {dimension_numbers = #tpu.dot_dimension_numbers<[1], [0], [0], [1], [0, 0, 1, 1], [], []>} : vector<16x32xf32>, vector<32x32xf32>, vector<16x32xf32> -> vector<16x32xf32>
    %c0_13 = arith.constant 0 : index
    %c0_14 = arith.constant 0 : index
    %15 = vector.load %arg7[%c0_13, %c0_14] : memref<1x32xf32, #tpu.memory_space<vmem>>, vector<1x32xf32>
    %16 = vector.broadcast %15 : vector<1x32xf32> to vector<16x32xf32>
    %17 = arith.addf %14, %16 : vector<16x32xf32>
    %18 = math.tanh %17 : vector<16x32xf32>
    %c0_15 = arith.constant 0 : index
    %c0_16 = arith.constant 0 : index
    %19 = vector.load %arg8[%c0_15, %c0_16] : memref<32x12xf32, #tpu.memory_space<vmem>>, vector<32x12xf32>
    %cst_17 = arith.constant dense<0.000000e+00> : vector<16x12xf32>
    %20 = tpu.matmul %18, %19, %cst_17 {dimension_numbers = #tpu.dot_dimension_numbers<[1], [0], [0], [1], [0, 0, 1, 1], [], []>} : vector<16x32xf32>, vector<32x12xf32>, vector<16x12xf32> -> vector<16x12xf32>
    %c0_18 = arith.constant 0 : index
    %c0_19 = arith.constant 0 : index
    %21 = vector.load %arg9[%c0_18, %c0_19] : memref<1x12xf32, #tpu.memory_space<vmem>>, vector<1x12xf32>
    %22 = vector.broadcast %21 : vector<1x12xf32> to vector<16x12xf32>
    %23 = arith.addf %20, %22 : vector<16x12xf32>
    %c0_20 = arith.constant 0 : index
    %c0_21 = arith.constant 0 : index
    %24 = vector.load %arg10[%c0_20, %c0_21] : memref<16x12xf32, #tpu.memory_space<vmem>>, vector<16x12xf32>
    tpu.vector_store %arg10[%c0_20, %c0_21], %23 {strides = array<i32>} : memref<16x12xf32, #tpu.memory_space<vmem>>, vector<16x12xf32>,
    return
  }
  func.func @transform_0(%arg0: i32) -> (i32, i32) {
    %c0_i32 = arith.constant 0 : i32
    %c0_i32_0 = arith.constant 0 : i32
    return %arg0, %c0_i32 : i32, i32
  }
  func.func @transform_1(%arg0: i32) -> (i32, i32) {
    %c0_i32 = arith.constant 0 : i32
    %c0_i32_0 = arith.constant 0 : i32
    %c0_i32_1 = arith.constant 0 : i32
    return %c0_i32, %c0_i32_0 : i32, i32
  }
  func.func @transform_2(%arg0: i32) -> (i32, i32) {
    %c0_i32 = arith.constant 0 : i32
    %c0_i32_0 = arith.constant 0 : i32
    %c0_i32_1 = arith.constant 0 : i32
    return %c0_i32, %c0_i32_0 : i32, i32
  }
  func.func @transform_3(%arg0: i32) -> (i32, i32) {
    %c0_i32 = arith.constant 0 : i32
    %c0_i32_0 = arith.constant 0 : i32
    %c0_i32_1 = arith.constant 0 : i32
    return %c0_i32, %c0_i32_0 : i32, i32
  }
  func.func @transform_4(%arg0: i32) -> (i32, i32) {
    %c0_i32 = arith.constant 0 : i32
    %c0_i32_0 = arith.constant 0 : i32
    %c0_i32_1 = arith.constant 0 : i32
    return %c0_i32, %c0_i32_0 : i32, i32
  }
  func.func @transform_5(%arg0: i32) -> (i32, i32) {
    %c0_i32 = arith.constant 0 : i32
    %c0_i32_0 = arith.constant 0 : i32
    %c0_i32_1 = arith.constant 0 : i32
    return %c0_i32, %c0_i32_0 : i32, i32
  }
  func.func @transform_6(%arg0: i32) -> (i32, i32) {
    %c0_i32 = arith.constant 0 : i32
    %c0_i32_0 = arith.constant 0 : i32
    %c0_i32_1 = arith.constant 0 : i32
    return %c0_i32, %c0_i32_0 : i32, i32
  }
  func.func @transform_7(%arg0: i32) -> (i32, i32) {
    %c0_i32 = arith.constant 0 : i32
    %c0_i32_0 = arith.constant 0 : i32
    %c0_i32_1 = arith.constant 0 : i32
    return %c0_i32, %c0_i32_0 : i32, i32
  }
  func.func @transform_8(%arg0: i32) -> (i32, i32) {
    %c0_i32 = arith.constant 0 : i32
    %c0_i32_0 = arith.constant 0 : i32
    %c0_i32_1 = arith.constant 0 : i32
    return %c0_i32, %c0_i32_0 : i32, i32
  }
  func.func @transform_9(%arg0: i32) -> (i32, i32) {
    %c0_i32 = arith.constant 0 : i32
    %c0_i32_0 = arith.constant 0 : i32
    return %arg0, %c0_i32 : i32, i32
  }
}

</mosaic_0001>

<llo_original>
// kernel: tpu_custom_call.1
$region0: #{tpu_custom_call.1}
  #allocation0 [shape = 'u32[]', space=smem, size = 0x4, offset = 0x4, fixed_abs, tag = 'smem constant byte address 0x4 - core index']
  #allocation1 [shape = 'u32[144,128]{1,0:T(1,128)}', space=vmem, size = 0x12000, scoped, tag = 'internal scratch']
  %s0 = inlined_call_operand.vmem [shape: f32[16,400], index: 0, kind: input, shape index: {}]
  %s1 = inlined_call_operand.vmem [shape: f32[400,32], index: 1, kind: input, shape index: {}]
  %s2 = inlined_call_operand.vmem [shape: f32[1,32], index: 2, kind: input, shape index: {}]
  %s3 = inlined_call_operand.vmem [shape: f32[32,32], index: 3, kind: input, shape index: {}]
  %s4 = inlined_call_operand.vmem [shape: f32[1,32], index: 4, kind: input, shape index: {}]
  %s5 = inlined_call_operand.vmem [shape: f32[32,32], index: 5, kind: input, shape index: {}]
  %s6 = inlined_call_operand.vmem [shape: f32[1,32], index: 6, kind: input, shape index: {}]
  %s7 = inlined_call_operand.vmem [shape: f32[32,12], index: 7, kind: input, shape index: {}]
  %s8 = inlined_call_operand.vmem [shape: f32[1,12], index: 8, kind: input, shape index: {}]
  %s9 = inlined_call_operand.hbm [shape: f32[16,12], index: 9, kind: output, shape index: {}]
  %s10 = sld [smem:[#allocation0]]
  $region46: #{tpu_custom_call.1} parent=0
    _
  %s12 = ssub.s32 1, %s10
  %s13 = scalar_select 0, %s12, %s10
  $region1: #{tpu_custom_call.1} parent=0
    #allocation2 [shape = 'u8[8192]{0}', space=vmem, size = 0x2000, scoped, tag = 'output window, operand 0, single buffered']
    #allocation3 [shape = 's32[1]{0}', space=sflag, size = 0x4, scoped, tag = 'scoped memory for tpu_custom_call.1']
    %14 = vsyncpa [#allocation3], 0
    // Predicated region
    $region2: #{tpu_custom_call.1} parent=1 // pred_check
      _
    $region3: #{tpu_custom_call.1} parent=1 // pred_check_branch
      %16 = sbr.rel (0) target = $region5
    $region4: #{tpu_custom_call.1} parent=1 // pred_region
      _
    $region5: #{tpu_custom_call.1} parent=1 // pred_fallthru
      _
    // Predicated region
    $region6: #{tpu_custom_call.1} parent=1 // pred_check
      _
    $region7: #{tpu_custom_call.1} parent=1 // pred_check_branch
      %18 = sbr.rel (0) target = $region9
    $region8: #{tpu_custom_call.1} parent=1 // pred_region
      _
    $region9: #{tpu_custom_call.1} parent=1 // pred_fallthru
      _
    // Predicated region
    $region10: #{tpu_custom_call.1} parent=1 // pred_check
      _
    $region11: #{tpu_custom_call.1} parent=1 // pred_check_branch
      %20 = sbr.rel (0) target = $region13
    $region12: #{tpu_custom_call.1} parent=1 // pred_region
      _
    $region13: #{tpu_custom_call.1} parent=1 // pred_fallthru
      _
    // Predicated region
    $region14: #{tpu_custom_call.1} parent=1 // pred_check
      _
    $region15: #{tpu_custom_call.1} parent=1 // pred_check_branch
      %22 = sbr.rel (0) target = $region17
    $region16: #{tpu_custom_call.1} parent=1 // pred_region
      _
    $region17: #{tpu_custom_call.1} parent=1 // pred_fallthru
      _
    // Predicated region
    $region18: #{tpu_custom_call.1} parent=1 // pred_check
      _
    $region19: #{tpu_custom_call.1} parent=1 // pred_check_branch
      %24 = sbr.rel (0) target = $region21
    $region20: #{tpu_custom_call.1} parent=1 // pred_region
      _
    $region21: #{tpu_custom_call.1} parent=1 // pred_fallthru
      _
    // Predicated region
    $region22: #{tpu_custom_call.1} parent=1 // pred_check
      _
    $region23: #{tpu_custom_call.1} parent=1 // pred_check_branch
      %26 = sbr.rel (0) target = $region25
    $region24: #{tpu_custom_call.1} parent=1 // pred_region
      _
    $region25: #{tpu_custom_call.1} parent=1 // pred_fallthru
      _
    // Predicated region
    $region26: #{tpu_custom_call.1} parent=1 // pred_check
      _
    $region27: #{tpu_custom_call.1} parent=1 // pred_check_branch
      %28 = sbr.rel (0) target = $region29
    $region28: #{tpu_custom_call.1} parent=1 // pred_region
      _
    $region29: #{tpu_custom_call.1} parent=1 // pred_fallthru
      _
    // Predicated region
    $region30: #{tpu_custom_call.1} parent=1 // pred_check
      _
    $region31: #{tpu_custom_call.1} parent=1 // pred_check_branch
      %30 = sbr.rel (0) target = $region33
    $region32: #{tpu_custom_call.1} parent=1 // pred_region
      _
    $region33: #{tpu_custom_call.1} parent=1 // pred_fallthru
      _
    // Predicated region
    $region34: #{tpu_custom_call.1} parent=1 // pred_check
      _
    $region35: #{tpu_custom_call.1} parent=1 // pred_check_branch
      %32 = sbr.rel (0) target = $region37
    $region36: #{tpu_custom_call.1} parent=1 // pred_region
      _
    $region37: #{tpu_custom_call.1} parent=1 // pred_fallthru
      _
    %v33 = vld [vmem:[%s0] sm:$0xff]
    %v34 = vld [vmem:[%s0 + $0x8] sm:$0xff]
    %v35 = vld [vmem:[%s0 + $0x10] sm:$0xff]
    %v36 = vld [vmem:[%s0 + $0x18] sm:$0xff]
    %v37 = vld [vmem:[%s0 + $0x20] sm:$0xff]
    %v38 = vld [vmem:[%s0 + $0x28] sm:$0xff]
    %v39 = vld [vmem:[%s0 + $0x30] sm:$0xff]
    %v40 = vld [vmem:[%s0 + $0x38] sm:$0xff]
    %v41 = vld [vmem:[%s1] sm:$0xff]
    %v42 = vld [vmem:[%s1 + $0x8] sm:$0xff]
    %v43 = vld [vmem:[%s1 + $0x10] sm:$0xff]
    %v44 = vld [vmem:[%s1 + $0x18] sm:$0xff]
    %v45 = vld [vmem:[%s1 + $0x20] sm:$0xff]
    %v46 = vld [vmem:[%s1 + $0x28] sm:$0xff]
    %v47 = vld [vmem:[%s1 + $0x30] sm:$0xff]
    %v48 = vld [vmem:[%s1 + $0x38] sm:$0xff]
    %v49 = vld [vmem:[%s1 + $0x40] sm:$0xff]
    %v50 = vld [vmem:[%s1 + $0x48] sm:$0xff]
    %v51 = vld [vmem:[%s1 + $0x50] sm:$0xff]
    %v52 = vld [vmem:[%s1 + $0x58] sm:$0xff]
    %v53 = vld [vmem:[%s1 + $0x60] sm:$0xff]
    %v54 = vld [vmem:[%s1 + $0x68] sm:$0xff]
    %v55 = vld [vmem:[%s1 + $0x70] sm:$0xff]
    %v56 = vld [vmem:[%s1 + $0x78] sm:$0xff]
    %v57 = vld [vmem:[%s1 + $0x80] sm:$0xff]
    %v58 = vld [vmem:[%s1 + $0x88] sm:$0xff]
    %v59 = vld [vmem:[%s1 + $0x90] sm:$0xff]
    %v60 = vld [vmem:[%s1 + $0x98] sm:$0xff]
    %v61 = vld [vmem:[%s1 + $0xa0] sm:$0xff]
    %v62 = vld [vmem:[%s1 + $0xa8] sm:$0xff]
    %v63 = vld [vmem:[%s1 + $0xb0] sm:$0xff]
    %v64 = vld [vmem:[%s1 + $0xb8] sm:$0xff]
    %v65 = vld [vmem:[%s1 + $0xc0] sm:$0xff]
    %v66 = vld [vmem:[%s1 + $0xc8] sm:$0xff]
    %v67 = vld [vmem:[%s1 + $0xd0] sm:$0xff]
    %v68 = vld [vmem:[%s1 + $0xd8] sm:$0xff]
    %v69 = vld [vmem:[%s1 + $0xe0] sm:$0xff]
    %v70 = vld [vmem:[%s1 + $0xe8] sm:$0xff]
    %v71 = vld [vmem:[%s1 + $0xf0] sm:$0xff]
    %v72 = vld [vmem:[%s1 + $0xf8] sm:$0xff]
    %v73 = vld [vmem:[%s1 + $0x100] sm:$0xff]
    %v74 = vld [vmem:[%s1 + $0x108] sm:$0xff]
    %v75 = vld [vmem:[%s1 + $0x110] sm:$0xff]
    %v76 = vld [vmem:[%s1 + $0x118] sm:$0xff]
    %v77 = vld [vmem:[%s1 + $0x120] sm:$0xff]
    %v78 = vld [vmem:[%s1 + $0x128] sm:$0xff]
    %v79 = vld [vmem:[%s1 + $0x130] sm:$0xff]
    %v80 = vld [vmem:[%s1 + $0x138] sm:$0xff]
    %v81 = vld [vmem:[%s1 + $0x140] sm:$0xff]
    %v82 = vld [vmem:[%s1 + $0x148] sm:$0xff]
    %v83 = vld [vmem:[%s1 + $0x150] sm:$0xff]
    %v84 = vld [vmem:[%s1 + $0x158] sm:$0xff]
    %v85 = vld [vmem:[%s1 + $0x160] sm:$0xff]
    %v86 = vld [vmem:[%s1 + $0x168] sm:$0xff]
    %v87 = vld [vmem:[%s1 + $0x170] sm:$0xff]
    %v88 = vld [vmem:[%s1 + $0x178] sm:$0xff]
    %v89 = vld [vmem:[%s1 + $0x180] sm:$0xff]
    %v90 = vld [vmem:[%s1 + $0x188] sm:$0xff]
    %v91 = vld [vmem:[%s2] sm:$0x1]
    %v93 = vlaneseq
    %v94 = vshrl.u32 %v93, 7
    %v95 = vsub.s32 0, %v94
    %v96 = vrot.slane %v91, %v95
    %vm98 = vcmask 130048
    %v100 = vsel %vm98, %v36, 0
    %v103 = vsel %vm98, %v40, 0
    %105 = vmatprep.subr.mxu0 0.0
    %106 = vmatpush1.msra.mxu0 %v41
    %107 = vmatprep.subr.mxu0 0.0
    %108 = vmatpush1.msra.mxu0 %v42
    %109 = vmatprep.subr.mxu0 0.0
    %110 = vmatpush1.msra.mxu0 %v43
    %111 = vmatprep.subr.mxu0 0.0
    %112 = vmatpush1.msra.mxu0 %v44
    %113 = vmatprep.subr.mxu0 0.0
    %114 = vmatpush1.msra.mxu0 %v45
    %115 = vmatprep.subr.mxu0 0.0
    %116 = vmatpush1.msra.mxu0 %v46
    %117 = vmatprep.subr.mxu0 0.0
    %118 = vmatpush1.msra.mxu0 %v47
    %119 = vmatprep.subr.mxu0 0.0
    %120 = vmatpush1.msra.mxu0 %v48
    %121 = vmatprep.subr.mxu0 0.0
    %122 = vmatpush1.msra.mxu0 %v49
    %123 = vmatprep.subr.mxu0 0.0
    %124 = vmatpush1.msra.mxu0 %v50
    %125 = vmatprep.subr.mxu0 0.0
    %126 = vmatpush1.msra.mxu0 %v51
    %127 = vmatprep.subr.mxu0 0.0
    %128 = vmatpush1.msra.mxu0 %v52
    %129 = vmatprep.subr.mxu0 0.0
    %130 = vmatpush1.msra.mxu0 %v53
    %131 = vmatprep.subr.mxu0 0.0
    %132 = vmatpush1.msra.mxu0 %v54
    %133 = vmatprep.subr.mxu0 0.0
    %134 = vmatpush1.msra.mxu0 %v55
    %135 = vmatprep.subr.mxu0 0.0
    %136 = vmatpush1.msra.mxu0 %v56
    %137 = vmatprep.subr.mxu0 0.0
    %138 = vmatpush1.msra.mxu0 %v57
    %139 = vmatprep.subr.mxu0 0.0
    %140 = vmatpush1.msra.mxu0 %v58
    %141 = vmatprep.subr.mxu0 0.0
    %142 = vmatpush1.msra.mxu0 %v59
    %143 = vmatprep.subr.mxu0 0.0
    %144 = vmatpush1.msra.mxu0 %v60
    %145 = vmatprep.subr.mxu0 0.0
    %146 = vmatpush1.msra.mxu0 %v61
    %147 = vmatprep.subr.mxu0 0.0
    %148 = vmatpush1.msra.mxu0 %v62
    %149 = vmatprep.subr.mxu0 0.0
    %150 = vmatpush1.msra.mxu0 %v63
    %151 = vmatprep.subr.mxu0 0.0
    %152 = vmatpush1.msra.mxu0 %v64
    %153 = vmatprep.subr.mxu0 0.0
    %154 = vmatpush1.msra.mxu0 %v65
    %155 = vmatprep.subr.mxu0 0.0
    %156 = vmatpush1.msra.mxu0 %v66
    %157 = vmatprep.subr.mxu0 0.0
    %158 = vmatpush1.msra.mxu0 %v67
    %159 = vmatprep.subr.mxu0 0.0
    %160 = vmatpush1.msra.mxu0 %v68
    %161 = vmatprep.subr.mxu0 0.0
    %162 = vmatpush1.msra.mxu0 %v69
    %163 = vmatprep.subr.mxu0 0.0
    %164 = vmatpush1.msra.mxu0 %v70
    %165 = vmatprep.subr.mxu0 0.0
    %166 = vmatpush1.msra.mxu0 %v71
    %167 = vmatprep.subr.mxu0 0.0
    %168 = vmatpush1.msra.mxu0 %v72
    %169 = vmatprep.mubr.f32.mxu0 %v34
    %170 = vmatmul.mubr.f32.gmra.mrb[0].mxu0 %v33
    %v171 = vpop.f32.mrb[0].mxu0
    %v172 = vadd.f32 %v96, %v171
    %v173 = vpop.f32.mrb[0].mxu0
    %174 = vmatprep.mubr.f32.mxu0 %v38
    %175 = vmatmul.mubr.f32.gmra.mrb[0].mxu0 %v37
    %v176 = vpop.f32.mrb[0].mxu0
    %v177 = vadd.f32 %v96, %v176
    %v178 = vpop.f32.mrb[0].mxu0
    %179 = vdwg.mxu0
    %180 = vmatprep.subr.mxu0 0.0
    %181 = vmatpush1.msra.mxu0 %v73
    %182 = vmatprep.subr.mxu0 0.0
    %183 = vmatpush1.msra.mxu0 %v74
    %184 = vmatprep.subr.mxu0 0.0
    %185 = vmatpush1.msra.mxu0 %v75
    %186 = vmatprep.subr.mxu0 0.0
    %187 = vmatpush1.msra.mxu0 %v76
    %188 = vmatprep.subr.mxu0 0.0
    %189 = vmatpush1.msra.mxu0 %v77
    %190 = vmatprep.subr.mxu0 0.0
    %191 = vmatpush1.msra.mxu0 %v78
    %192 = vmatprep.subr.mxu0 0.0
    %193 = vmatpush1.msra.mxu0 %v79
    %194 = vmatprep.subr.mxu0 0.0
    %195 = vmatpush1.msra.mxu0 %v80
    %196 = vmatprep.subr.mxu0 0.0
    %197 = vmatpush1.msra.mxu0 %v81
    %198 = vmatprep.subr.mxu0 0.0
    %199 = vmatpush1.msra.mxu0 %v82
    %200 = vmatprep.subr.mxu0 0.0
    %201 = vmatpush1.msra.mxu0 %v83
    %202 = vmatprep.subr.mxu0 0.0
    %203 = vmatpush1.msra.mxu0 %v84
    %204 = vmatprep.subr.mxu0 0.0
    %205 = vmatpush1.msra.mxu0 %v85
    %206 = vmatprep.subr.mxu0 0.0
    %207 = vmatpush1.msra.mxu0 %v86
    %208 = vmatprep.subr.mxu0 0.0
    %209 = vmatpush1.msra.mxu0 %v87
    %210 = vmatprep.subr.mxu0 0.0
    %211 = vmatpush1.msra.mxu0 %v88
    %212 = vmatprep.subr.mxu0 0.0
    %213 = vmatpush1.msra.mxu0 %v89
    %214 = vmatprep.subr.mxu0 0.0
    %215 = vmatpush1.msra.mxu0 %v90
    %216 = vmatprep.subr.mxu0 0.0
    %217 = vmatpush1.msra.mxu0 0.0
    %218 = vmatprep.subr.mxu0 0.0
    %219 = vmatpush1.msra.mxu0 0.0
    %220 = vmatprep.subr.mxu0 0.0
    %221 = vmatpush1.msra.mxu0 0.0
    %222 = vmatprep.subr.mxu0 0.0
    %223 = vmatpush1.msra.mxu0 0.0
    %224 = vmatprep.subr.mxu0 0.0
    %225 = vmatpush1.msra.mxu0 0.0
    %226 = vmatprep.subr.mxu0 0.0
    %227 = vmatpush1.msra.mxu0 0.0
    %228 = vmatprep.subr.mxu0 0.0
    %229 = vmatpush1.msra.mxu0 0.0
    %230 = vmatprep.subr.mxu0 0.0
    %231 = vmatpush1.msra.mxu0 0.0
    %232 = vmatprep.subr.mxu0 0.0
    %233 = vmatpush1.msra.mxu0 0.0
    %234 = vmatprep.subr.mxu0 0.0
    %235 = vmatpush1.msra.mxu0 0.0
    %236 = vmatprep.subr.mxu0 0.0
    %237 = vmatpush1.msra.mxu0 0.0
    %238 = vmatprep.subr.mxu0 0.0
    %239 = vmatpush1.msra.mxu0 0.0
    %240 = vmatprep.subr.mxu0 0.0
    %241 = vmatpush1.msra.mxu0 0.0
    %242 = vmatprep.subr.mxu0 0.0
    %243 = vmatpush1.msra.mxu0 0.0
    %244 = vmatprep.mubr.f32.mxu0 %v100
    %245 = vmatmul.mubr.f32.gmra.mrb[0].mxu0 %v35
    %v246 = vpop.f32.mrb[0].mxu0
    %v247 = vadd.f32 %v172, %v246
    %v248 = vpop.f32.mrb[0].mxu0
    %249 = vmatprep.mubr.f32.mxu0 %v103
    %250 = vmatmul.mubr.f32.gmra.mrb[0].mxu0 %v39
    %v251 = vpop.f32.mrb[0].mxu0
    %v252 = vadd.f32 %v177, %v251
    %v253 = vpop.f32.mrb[0].mxu0
    %254 = vdwg.mxu0
    %v255 = vtanh.pop %v247
    %v256 = vtanh.pop %v252
    %v257 = vld [vmem:[%s3] sm:$0xff]
    %v258 = vld [vmem:[%s3 + $0x8] sm:$0xff]
    %v259 = vld [vmem:[%s3 + $0x10] sm:$0xff]
    %v260 = vld [vmem:[%s3 + $0x18] sm:$0xff]
    %v261 = vld [vmem:[%s4] sm:$0x1]
    %v263 = vlaneseq
    %v264 = vshrl.u32 %v263, 7
    %v265 = vsub.s32 0, %v264
    %v266 = vrot.slane %v261, %v265
    %vm268 = vcmask 261120
    %v270 = vsel %vm268, %v255, 0
    %v273 = vsel %vm268, %v256, 0
    %275 = vmatprep.subr.mxu0 0.0
    %276 = vmatpush1.msra.mxu0 %v257
    %277 = vmatprep.subr.mxu0 0.0
    %278 = vmatpush1.msra.mxu0 %v258
    %279 = vmatprep.subr.mxu0 0.0
    %280 = vmatpush1.msra.mxu0 %v259
    %281 = vmatprep.subr.mxu0 0.0
    %282 = vmatpush1.msra.mxu0 %v260
    %283 = vmatprep.subr.mxu0 0.0
    %284 = vmatpush1.msra.mxu0 0.0
    %285 = vmatprep.subr.mxu0 0.0
    %286 = vmatpush1.msra.mxu0 0.0
    %287 = vmatprep.subr.mxu0 0.0
    %288 = vmatpush1.msra.mxu0 0.0
    %289 = vmatprep.subr.mxu0 0.0
    %290 = vmatpush1.msra.mxu0 0.0
    %291 = vmatprep.subr.mxu0 0.0
    %292 = vmatpush1.msra.mxu0 0.0
    %293 = vmatprep.subr.mxu0 0.0
    %294 = vmatpush1.msra.mxu0 0.0
    %295 = vmatprep.subr.mxu0 0.0
    %296 = vmatpush1.msra.mxu0 0.0
    %297 = vmatprep.subr.mxu0 0.0
    %298 = vmatpush1.msra.mxu0 0.0
    %299 = vmatprep.subr.mxu0 0.0
    %300 = vmatpush1.msra.mxu0 0.0
    %301 = vmatprep.subr.mxu0 0.0
    %302 = vmatpush1.msra.mxu0 0.0
    %303 = vmatprep.subr.mxu0 0.0
    %304 = vmatpush1.msra.mxu0 0.0
    %305 = vmatprep.subr.mxu0 0.0
    %306 = vmatpush1.msra.mxu0 0.0
    %307 = vmatprep.subr.mxu0 0.0
    %308 = vmatpush1.msra.mxu0 0.0
    %309 = vmatprep.subr.mxu0 0.0
    %310 = vmatpush1.msra.mxu0 0.0
    %311 = vmatprep.subr.mxu0 0.0
    %312 = vmatpush1.msra.mxu0 0.0
    %313 = vmatprep.subr.mxu0 0.0
    %314 = vmatpush1.msra.mxu0 0.0
    %315 = vmatprep.subr.mxu0 0.0
    %316 = vmatpush1.msra.mxu0 0.0
    %317 = vmatprep.subr.mxu0 0.0
    %318 = vmatpush1.msra.mxu0 0.0
    %319 = vmatprep.subr.mxu0 0.0
    %320 = vmatpush1.msra.mxu0 0.0
    %321 = vmatprep.subr.mxu0 0.0
    %322 = vmatpush1.msra.mxu0 0.0
    %323 = vmatprep.subr.mxu0 0.0
    %324 = vmatpush1.msra.mxu0 0.0
    %325 = vmatprep.subr.mxu0 0.0
    %326 = vmatpush1.msra.mxu0 0.0
    %327 = vmatprep.subr.mxu0 0.0
    %328 = vmatpush1.msra.mxu0 0.0
    %329 = vmatprep.subr.mxu0 0.0
    %330 = vmatpush1.msra.mxu0 0.0
    %331 = vmatprep.subr.mxu0 0.0
    %332 = vmatpush1.msra.mxu0 0.0
    %333 = vmatprep.subr.mxu0 0.0
    %334 = vmatpush1.msra.mxu0 0.0
    %335 = vmatprep.subr.mxu0 0.0
    %336 = vmatpush1.msra.mxu0 0.0
    %337 = vmatprep.subr.mxu0 0.0
    %338 = vmatpush1.msra.mxu0 0.0
    %339 = vmatprep.mubr.f32.mxu0 0.0
    %340 = vmatmul.mubr.f32.gmra.mrb[0].mxu0 %v270
    %v341 = vpop.f32.mrb[0].mxu0
    %v342 = vadd.f32 %v266, %v341
    %v343 = vpop.f32.mrb[0].mxu0
    %344 = vmatprep.mubr.f32.mxu0 0.0
    %345 = vmatmul.mubr.f32.gmra.mrb[0].mxu0 %v273
    %v346 = vpop.f32.mrb[0].mxu0
    %v347 = vadd.f32 %v266, %v346
    %v348 = vpop.f32.mrb[0].mxu0
    %349 = vdwg.mxu0
    %v350 = vtanh.pop %v342
    %v351 = vtanh.pop %v347
    %v352 = vld [vmem:[%s5] sm:$0xff]
    %v353 = vld [vmem:[%s5 + $0x8] sm:$0xff]
    %v354 = vld [vmem:[%s5 + $0x10] sm:$0xff]
    %v355 = vld [vmem:[%s5 + $0x18] sm:$0xff]
    %v356 = vld [vmem:[%s6] sm:$0x1]
    %v358 = vlaneseq
    %v359 = vshrl.u32 %v358, 7
    %v360 = vsub.s32 0, %v359
    %v361 = vrot.slane %v356, %v360
    %v364 = vsel %vm268, %v350, 0
    %v367 = vsel %vm268, %v351, 0
    %369 = vmatprep.subr.mxu0 0.0
    %370 = vmatpush1.msra.mxu0 %v352
    %371 = vmatprep.subr.mxu0 0.0
    %372 = vmatpush1.msra.mxu0 %v353
    %373 = vmatprep.subr.mxu0 0.0
    %374 = vmatpush1.msra.mxu0 %v354
    %375 = vmatprep.subr.mxu0 0.0
    %376 = vmatpush1.msra.mxu0 %v355
    %377 = vmatprep.subr.mxu0 0.0
    %378 = vmatpush1.msra.mxu0 0.0
    %379 = vmatprep.subr.mxu0 0.0
    %380 = vmatpush1.msra.mxu0 0.0
    %381 = vmatprep.subr.mxu0 0.0
    %382 = vmatpush1.msra.mxu0 0.0
    %383 = vmatprep.subr.mxu0 0.0
    %384 = vmatpush1.msra.mxu0 0.0
    %385 = vmatprep.subr.mxu0 0.0
    %386 = vmatpush1.msra.mxu0 0.0
    %387 = vmatprep.subr.mxu0 0.0
    %388 = vmatpush1.msra.mxu0 0.0
    %389 = vmatprep.subr.mxu0 0.0
    %390 = vmatpush1.msra.mxu0 0.0
    %391 = vmatprep.subr.mxu0 0.0
    %392 = vmatpush1.msra.mxu0 0.0
    %393 = vmatprep.subr.mxu0 0.0
    %394 = vmatpush1.msra.mxu0 0.0
    %395 = vmatprep.subr.mxu0 0.0
    %396 = vmatpush1.msra.mxu0 0.0
    %397 = vmatprep.subr.mxu0 0.0
    %398 = vmatpush1.msra.mxu0 0.0
    %399 = vmatprep.subr.mxu0 0.0
    %400 = vmatpush1.msra.mxu0 0.0
    %401 = vmatprep.subr.mxu0 0.0
    %402 = vmatpush1.msra.mxu0 0.0
    %403 = vmatprep.subr.mxu0 0.0
    %404 = vmatpush1.msra.mxu0 0.0
    %405 = vmatprep.subr.mxu0 0.0
    %406 = vmatpush1.msra.mxu0 0.0
    %407 = vmatprep.subr.mxu0 0.0
    %408 = vmatpush1.msra.mxu0 0.0
    %409 = vmatprep.subr.mxu0 0.0
    %410 = vmatpush1.msra.mxu0 0.0
    %411 = vmatprep.subr.mxu0 0.0
    %412 = vmatpush1.msra.mxu0 0.0
    %413 = vmatprep.subr.mxu0 0.0
    %414 = vmatpush1.msra.mxu0 0.0
    %415 = vmatprep.subr.mxu0 0.0
    %416 = vmatpush1.msra.mxu0 0.0
    %417 = vmatprep.subr.mxu0 0.0
    %418 = vmatpush1.msra.mxu0 0.0
    %419 = vmatprep.subr.mxu0 0.0
    %420 = vmatpush1.msra.mxu0 0.0
    %421 = vmatprep.subr.mxu0 0.0
    %422 = vmatpush1.msra.mxu0 0.0
    %423 = vmatprep.subr.mxu0 0.0
    %424 = vmatpush1.msra.mxu0 0.0
    %425 = vmatprep.subr.mxu0 0.0
    %426 = vmatpush1.msra.mxu0 0.0
    %427 = vmatprep.subr.mxu0 0.0
    %428 = vmatpush1.msra.mxu0 0.0
    %429 = vmatprep.subr.mxu0 0.0
    %430 = vmatpush1.msra.mxu0 0.0
    %431 = vmatprep.subr.mxu0 0.0
    %432 = vmatpush1.msra.mxu0 0.0
    %433 = vmatprep.mubr.f32.mxu0 0.0
    %434 = vmatmul.mubr.f32.gmra.mrb[0].mxu0 %v364
    %v435 = vpop.f32.mrb[0].mxu0
    %v436 = vadd.f32 %v361, %v435
    %v437 = vpop.f32.mrb[0].mxu0
    %438 = vmatprep.mubr.f32.mxu0 0.0
    %439 = vmatmul.mubr.f32.gmra.mrb[0].mxu0 %v367
    %v440 = vpop.f32.mrb[0].mxu0
    %v441 = vadd.f32 %v361, %v440
    %v442 = vpop.f32.mrb[0].mxu0
    %443 = vdwg.mxu0
    %v444 = vtanh.pop %v436
    %v445 = vtanh.pop %v441
    %v446 = vld [vmem:[%s7] sm:$0xff]
    %v447 = vld [vmem:[%s7 + $0x8] sm:$0xff]
    %v448 = vld [vmem:[%s7 + $0x10] sm:$0xff]
    %v449 = vld [vmem:[%s7 + $0x18] sm:$0xff]
    %v450 = vld [vmem:[%s8] sm:$0x1]
    %v452 = vlaneseq
    %v453 = vshrl.u32 %v452, 7
    %v454 = vsub.s32 0, %v453
    %v455 = vrot.slane %v450, %v454
    %v458 = vsel %vm268, %v444, 0
    %v461 = vsel %vm268, %v445, 0
    %463 = vmatprep.subr.mxu0 0.0
    %464 = vmatpush1.msra.mxu0 %v446
    %465 = vmatprep.subr.mxu0 0.0
    %466 = vmatpush1.msra.mxu0 %v447
    %467 = vmatprep.subr.mxu0 0.0
    %468 = vmatpush1.msra.mxu0 %v448
    %469 = vmatprep.subr.mxu0 0.0
    %470 = vmatpush1.msra.mxu0 %v449
    %471 = vmatprep.subr.mxu0 0.0
    %472 = vmatpush1.msra.mxu0 0.0
    %473 = vmatprep.subr.mxu0 0.0
    %474 = vmatpush1.msra.mxu0 0.0
    %475 = vmatprep.subr.mxu0 0.0
    %476 = vmatpush1.msra.mxu0 0.0
    %477 = vmatprep.subr.mxu0 0.0
    %478 = vmatpush1.msra.mxu0 0.0
    %479 = vmatprep.subr.mxu0 0.0
    %480 = vmatpush1.msra.mxu0 0.0
    %481 = vmatprep.subr.mxu0 0.0
    %482 = vmatpush1.msra.mxu0 0.0
    %483 = vmatprep.subr.mxu0 0.0
    %484 = vmatpush1.msra.mxu0 0.0
    %485 = vmatprep.subr.mxu0 0.0
    %486 = vmatpush1.msra.mxu0 0.0
    %487 = vmatprep.subr.mxu0 0.0
    %488 = vmatpush1.msra.mxu0 0.0
    %489 = vmatprep.subr.mxu0 0.0
    %490 = vmatpush1.msra.mxu0 0.0
    %491 = vmatprep.subr.mxu0 0.0
    %492 = vmatpush1.msra.mxu0 0.0
    %493 = vmatprep.subr.mxu0 0.0
    %494 = vmatpush1.msra.mxu0 0.0
    %495 = vmatprep.subr.mxu0 0.0
    %496 = vmatpush1.msra.mxu0 0.0
    %497 = vmatprep.subr.mxu0 0.0
    %498 = vmatpush1.msra.mxu0 0.0
    %499 = vmatprep.subr.mxu0 0.0
    %500 = vmatpush1.msra.mxu0 0.0
    %501 = vmatprep.subr.mxu0 0.0
    %502 = vmatpush1.msra.mxu0 0.0
    %503 = vmatprep.subr.mxu0 0.0
    %504 = vmatpush1.msra.mxu0 0.0
    %505 = vmatprep.subr.mxu0 0.0
    %506 = vmatpush1.msra.mxu0 0.0
    %507 = vmatprep.subr.mxu0 0.0
    %508 = vmatpush1.msra.mxu0 0.0
    %509 = vmatprep.subr.mxu0 0.0
    %510 = vmatpush1.msra.mxu0 0.0
    %511 = vmatprep.subr.mxu0 0.0
    %512 = vmatpush1.msra.mxu0 0.0
    %513 = vmatprep.subr.mxu0 0.0
    %514 = vmatpush1.msra.mxu0 0.0
    %515 = vmatprep.subr.mxu0 0.0
    %516 = vmatpush1.msra.mxu0 0.0
    %517 = vmatprep.subr.mxu0 0.0
    %518 = vmatpush1.msra.mxu0 0.0
    %519 = vmatprep.subr.mxu0 0.0
    %520 = vmatpush1.msra.mxu0 0.0
    %521 = vmatprep.subr.mxu0 0.0
    %522 = vmatpush1.msra.mxu0 0.0
    %523 = vmatprep.subr.mxu0 0.0
    %524 = vmatpush1.msra.mxu0 0.0
    %525 = vmatprep.subr.mxu0 0.0
    %526 = vmatpush1.msra.mxu0 0.0
    %527 = vmatprep.mubr.f32.mxu0 0.0
    %528 = vmatmul.mubr.f32.gmra.mrb[0].mxu0 %v458
    %v529 = vpop.f32.mrb[0].mxu0
    %v530 = vadd.f32 %v455, %v529
    %v531 = vpop.f32.mrb[0].mxu0
    %532 = vmatprep.mubr.f32.mxu0 0.0
    %533 = vmatmul.mubr.f32.gmra.mrb[0].mxu0 %v461
    %v534 = vpop.f32.mrb[0].mxu0
    %v535 = vadd.f32 %v455, %v534
    %v536 = vpop.f32.mrb[0].mxu0
    %537 = vdwg.mxu0
    %vm538 = vcmask 97280
    %539 = vst.msk [vmem:[#allocation2] sm:$0xff] %vm538, %v530
    %540 = vst.msk [vmem:[#allocation2 + $0x8] sm:$0xff] %vm538, %v535
    // Predicated region
    $region38: #{tpu_custom_call.1} parent=1 // pred_check
      _
    $region39: #{tpu_custom_call.1} parent=1 // pred_check_branch
      %542 = sbr.rel (0) target = $region41
    $region40: #{tpu_custom_call.1} parent=1 // pred_region
      %s544 = ssub.s32 256, 256
      %545 = vsyncadd [#allocation3], %s544
      %s546 = sshll.u32 [#allocation2], 4
      %s547 = int_to_ptr.vmem [resolvable:$true] %s546
      %552 = dma.vmem_to_hbm [thread:$0]  %s547, 256, %s9, [#allocation3], 128, 128, 8
    $region41: #{tpu_custom_call.1} parent=1 // pred_fallthru
      _
    // Predicated region
    $region42: #{tpu_custom_call.1} parent=1 // pred_check
      _
    $region43: #{tpu_custom_call.1} parent=1 // pred_check_branch
      %554 = sbr.rel (0) target = $region45
    $region44: #{tpu_custom_call.1} parent=1 // pred_region
      %555 = dma.done [#allocation3], 256
    $region45: #{tpu_custom_call.1} parent=1 // pred_fallthru
      _
    %556 = vsyncpa [#allocation3], 1

</llo_original>
